<compile_context>
chip_gen: v7x
topology: tpu7x:2x2x1
jax: 0.10.0
libtpu: 0.0.40
codegen_flags: <defaults>
</compile_context>

<pallas_src>
import functools

import jax
import jax.numpy as jnp
from jax.experimental import pallas as pl
from jax.experimental.pallas import tpu as pltpu


def _lfam_kernel(x_ref, w1t_ref, w2t_ref, e_ref, o_ref, pool_ref, *, C, W):
    TB = x_ref.shape[0]

    # --- channel pooling (avg + max) into a fused (2*TB, C) matrix ----------
    # Rows [0:TB] = avg-pooled vectors, rows [TB:2*TB] = max-pooled vectors.
    # Unrolled over channels (C is small for this module); each segment is a
    # contiguous W-lane slice of the lane-dense x block.
    for c in range(C):
        seg = x_ref[:, c * W:(c + 1) * W].astype(jnp.float32)          # (TB, W)
        pool_ref[0:TB, c:c + 1] = jnp.mean(seg, axis=-1, keepdims=True)
        pool_ref[TB:2 * TB, c:c + 1] = jnp.max(seg, axis=-1, keepdims=True)

    pooled = pool_ref[...]                                             # (2TB, C)

    # --- shared fc: one matmul chain for both avg and max rows --------------
    h = jnp.dot(pooled, w1t_ref[...].astype(jnp.float32),
                preferred_element_type=jnp.float32)                    # (2TB, H)
    h = jnp.maximum(h, 0.0)                                            # ReLU
    fc = jnp.dot(h, w2t_ref[...].astype(jnp.float32),
                 preferred_element_type=jnp.float32)                   # (2TB, C)

    # Split back into fc(avg) + fc(max) (via the scratch ref), then sigmoid.
    # sigmoid lowers to EUP exp/recip ops, off the VALU/store critical path.
    pool_ref[...] = fc
    att = jax.nn.sigmoid(pool_ref[0:TB, :] + pool_ref[TB:2 * TB, :])   # (TB, C)

    # --- lane-dense expand + multiply + store --------------------------------
    # att_exp[b, c*W + w] == att[b, c]; the one-hot expansion rides the MXU so
    # the final store is a full-width (C*W)-lane unmasked store.
    att_exp = jnp.dot(att, e_ref[...], preferred_element_type=jnp.float32)

    x = x_ref[...]                                                     # (TB, C*W)
    o_ref[...] = (att_exp.astype(x.dtype) * x).astype(o_ref.dtype)


def _pick_tb(batch, row_bytes):
    # Per-block budget ~4 MiB: 2 (double-buffer) x (in + out) blocks then stay
    # well inside the 32 MiB scoped-VMEM default and v7x's 64 MiB physical VMEM.
    budget = 4 * 1024 * 1024
    cap = max(1, budget // max(1, row_bytes))
    for cand in (1024, 512, 256, 128, 64, 32, 16, 8):  # keep sublane dim % 8 == 0
        if cand <= cap and batch % cand == 0:
            return cand
    return batch  # small / awkward batch: one block spanning the full batch dim


@jax.jit
def lfam_forward(x, w1t, w2t):
    B, C, W = x.shape
    H = w1t.shape[1]
    CW = C * W

    # Lane-dense presentation of x / out: last dim C*W (a multiple of 128 for
    # the intended C=16, W=48 case) instead of the 48-wide last dim.
    x_flat = x.reshape(B, CW)

    # Constant one-hot expansion matrix: E[c, c*W + w] = 1.
    expand = jnp.repeat(jnp.eye(C, dtype=jnp.float32), W, axis=1)      # (C, CW)

    tb = _pick_tb(B, CW * x.dtype.itemsize)
    grid = (B // tb,)

    kernel = functools.partial(_lfam_kernel, C=C, W=W)

    out_flat = pl.pallas_call(
        kernel,
        out_shape=jax.ShapeDtypeStruct((B, CW), x.dtype),
        grid_spec=pltpu.PrefetchScalarGridSpec(
            num_scalar_prefetch=0,
            grid=grid,
            in_specs=[
                pl.BlockSpec((tb, CW), lambda i: (i, 0)),   # x (lane-dense)
                pl.BlockSpec((C, H), lambda i: (0, 0)),     # W1.T (resident)
                pl.BlockSpec((H, C), lambda i: (0, 0)),     # W2.T (resident)
                pl.BlockSpec((C, CW), lambda i: (0, 0)),    # one-hot expand
            ],
            out_specs=pl.BlockSpec((tb, CW), lambda i: (i, 0)),
            scratch_shapes=[pltpu.VMEM((2 * tb, C), jnp.float32)],
        ),
        compiler_params=pltpu.CompilerParams(
            dimension_semantics=("parallel",),
        ),
    )(x_flat, w1t, w2t, expand)

    return out_flat.reshape(B, C, W)


def lfam_reference(x, w1t, w2t):
    # Pure-JAX reference of the same math for a sanity check.
    avg = jnp.mean(x, axis=-1)
    mx = jnp.max(x, axis=-1)

    def fc(v):
        return jnp.maximum(v @ w1t, 0.0) @ w2t

    att = jax.nn.sigmoid(fc(avg) + fc(mx))
    return att[:, :, None] * x


if __name__ == "__main__":
    B, C, W = 2, 16, 48           # W must be 48 (hard-coded expand in reference)
    ratio = 4
    H = C // ratio

    key = jax.random.PRNGKey(0)
    kx, k1, k2 = jax.random.split(key, 3)

    x = jax.random.normal(kx, (B, C, W), dtype=jnp.float32)

    # Deterministic "Linear(channel, channel//ratio, bias=False)" weights.
    # PyTorch stores Linear weight as (out, in); we pass the transposes.
    W1 = jax.random.normal(k1, (H, C), dtype=jnp.float32) * 0.1   # fc[0].weight
    W2 = jax.random.normal(k2, (C, H), dtype=jnp.float32) * 0.1   # fc[2].weight
    w1t = W1.T                                                    # (C, H)
    w2t = W2.T                                                    # (H, C)

    out = lfam_forward(x, w1t, w2t)
    out = jax.block_until_ready(out)

    ref = lfam_reference(x, w1t, w2t)
    assert out.shape == (B, C, W)
    assert jnp.allclose(out, ref, atol=1e-5, rtol=1e-5)

    print("KERNEL_OK")
</pallas_src>

<mosaic_0001>
module attributes {stable_mosaic.version = 11 : i64} {
  func.func @_lfam_kernel(%arg0: i32, %arg1: memref<2x768xf32, #tpu.memory_space<vmem>>, %arg2: memref<16x4xf32, #tpu.memory_space<vmem>>, %arg3: memref<4x16xf32, #tpu.memory_space<vmem>>, %arg4: memref<16x768xf32, #tpu.memory_space<vmem>>, %arg5: memref<2x768xf32, #tpu.memory_space<vmem>>, %arg6: memref<4x16xf32, #tpu.memory_space<vmem>>) attributes {dimension_semantics = [#tpu.dimension_semantics<parallel>], iteration_bounds = array<i64: 1>, scalar_prefetch = 0 : i64, scratch_operands = 1 : i64, tpu.core_type = #tpu.core_type<tc>, window_params = [{transform_indices = @transform_0, window_bounds = array<i64: 2, 768>}, {pipeline_mode = #tpu.pipeline_mode<synchronous>, transform_indices = @transform_1, window_bounds = array<i64: 16, 4>}, {pipeline_mode = #tpu.pipeline_mode<synchronous>, transform_indices = @transform_2, window_bounds = array<i64: 4, 16>}, {pipeline_mode = #tpu.pipeline_mode<synchronous>, transform_indices = @transform_3, window_bounds = array<i64: 16, 768>}, {transform_indices = @transform_4, window_bounds = array<i64: 2, 768>}]} {
    %c0 = arith.constant 0 : index
    %c0_0 = arith.constant 0 : index
    %0 = vector.load %arg1[%c0, %c0_0] : memref<2x768xf32, #tpu.memory_space<vmem>>, vector<2x48xf32>
    %cst = arith.constant dense<0.000000e+00> : vector<2xf32>
    %1 = vector.multi_reduction <add>, %0, %cst [1] : vector<2x48xf32> to vector<2xf32>
    %2 = vector.shape_cast %1 : vector<2xf32> to vector<2x1xf32>
    %cst_1 = arith.constant 4.800000e+01 : f32
    %3 = vector.broadcast %cst_1 : f32 to vector<2x1xf32>
    %4 = arith.divf %2, %3 : vector<2x1xf32>
    %c0_2 = arith.constant 0 : index
    %c0_3 = arith.constant 0 : index
    %5 = vector.load %arg6[%c0_2, %c0_3] : memref<4x16xf32, #tpu.memory_space<vmem>>, vector<2x1xf32>
    tpu.vector_store %arg6[%c0_2, %c0_3], %4 {strides = array<i32>} : memref<4x16xf32, #tpu.memory_space<vmem>>, vector<2x1xf32>,
    %cst_4 = arith.constant dense<0xFF800000> : vector<2xf32>
    %6 = vector.multi_reduction <maximumf>, %0, %cst_4 [1] : vector<2x48xf32> to vector<2xf32>
    %7 = vector.shape_cast %6 : vector<2xf32> to vector<2x1xf32>
    %c2 = arith.constant 2 : index
    %c0_5 = arith.constant 0 : index
    %8 = vector.load %arg6[%c2, %c0_5] : memref<4x16xf32, #tpu.memory_space<vmem>>, vector<2x1xf32>
    tpu.vector_store %arg6[%c2, %c0_5], %7 {strides = array<i32>} : memref<4x16xf32, #tpu.memory_space<vmem>>, vector<2x1xf32>,
    %c0_6 = arith.constant 0 : index
    %c48 = arith.constant 48 : index
    %9 = vector.load %arg1[%c0_6, %c48] : memref<2x768xf32, #tpu.memory_space<vmem>>, vector<2x48xf32>
    %cst_7 = arith.constant dense<0.000000e+00> : vector<2xf32>
    %10 = vector.multi_reduction <add>, %9, %cst_7 [1] : vector<2x48xf32> to vector<2xf32>
    %11 = vector.shape_cast %10 : vector<2xf32> to vector<2x1xf32>
    %cst_8 = arith.constant 4.800000e+01 : f32
    %12 = vector.broadcast %cst_8 : f32 to vector<2x1xf32>
    %13 = arith.divf %11, %12 : vector<2x1xf32>
    %c0_9 = arith.constant 0 : index
    %c1 = arith.constant 1 : index
    %14 = vector.load %arg6[%c0_9, %c1] : memref<4x16xf32, #tpu.memory_space<vmem>>, vector<2x1xf32>
    tpu.vector_store %arg6[%c0_9, %c1], %13 {strides = array<i32>} : memref<4x16xf32, #tpu.memory_space<vmem>>, vector<2x1xf32>,
    %cst_10 = arith.constant dense<0xFF800000> : vector<2xf32>
    %15 = vector.multi_reduction <maximumf>, %9, %cst_10 [1] : vector<2x48xf32> to vector<2xf32>
    %16 = vector.shape_cast %15 : vector<2xf32> to vector<2x1xf32>
    %c2_11 = arith.constant 2 : index
    %c1_12 = arith.constant 1 : index
    %17 = vector.load %arg6[%c2_11, %c1_12] : memref<4x16xf32, #tpu.memory_space<vmem>>, vector<2x1xf32>
    tpu.vector_store %arg6[%c2_11, %c1_12], %16 {strides = array<i32>} : memref<4x16xf32, #tpu.memory_space<vmem>>, vector<2x1xf32>,
    %c0_13 = arith.constant 0 : index
    %c96 = arith.constant 96 : index
    %18 = vector.load %arg1[%c0_13, %c96] : memref<2x768xf32, #tpu.memory_space<vmem>>, vector<2x48xf32>
    %cst_14 = arith.constant dense<0.000000e+00> : vector<2xf32>
    %19 = vector.multi_reduction <add>, %18, %cst_14 [1] : vector<2x48xf32> to vector<2xf32>
    %20 = vector.shape_cast %19 : vector<2xf32> to vector<2x1xf32>
    %cst_15 = arith.constant 4.800000e+01 : f32
    %21 = vector.broadcast %cst_15 : f32 to vector<2x1xf32>
    %22 = arith.divf %20, %21 : vector<2x1xf32>
    %c0_16 = arith.constant 0 : index
    %c2_17 = arith.constant 2 : index
    %23 = vector.load %arg6[%c0_16, %c2_17] : memref<4x16xf32, #tpu.memory_space<vmem>>, vector<2x1xf32>
    tpu.vector_store %arg6[%c0_16, %c2_17], %22 {strides = array<i32>} : memref<4x16xf32, #tpu.memory_space<vmem>>, vector<2x1xf32>,
    %cst_18 = arith.constant dense<0xFF800000> : vector<2xf32>
    %24 = vector.multi_reduction <maximumf>, %18, %cst_18 [1] : vector<2x48xf32> to vector<2xf32>
    %25 = vector.shape_cast %24 : vector<2xf32> to vector<2x1xf32>
    %c2_19 = arith.constant 2 : index
    %c2_20 = arith.constant 2 : index
    %26 = vector.load %arg6[%c2_19, %c2_20] : memref<4x16xf32, #tpu.memory_space<vmem>>, vector<2x1xf32>
    tpu.vector_store %arg6[%c2_19, %c2_20], %25 {strides = array<i32>} : memref<4x16xf32, #tpu.memory_space<vmem>>, vector<2x1xf32>,
    %c0_21 = arith.constant 0 : index
    %c144 = arith.constant 144 : index
    %27 = vector.load %arg1[%c0_21, %c144] : memref<2x768xf32, #tpu.memory_space<vmem>>, vector<2x48xf32>
    %cst_22 = arith.constant dense<0.000000e+00> : vector<2xf32>
    %28 = vector.multi_reduction <add>, %27, %cst_22 [1] : vector<2x48xf32> to vector<2xf32>
    %29 = vector.shape_cast %28 : vector<2xf32> to vector<2x1xf32>
    %cst_23 = arith.constant 4.800000e+01 : f32
    %30 = vector.broadcast %cst_23 : f32 to vector<2x1xf32>
    %31 = arith.divf %29, %30 : vector<2x1xf32>
    %c0_24 = arith.constant 0 : index
    %c3 = arith.constant 3 : index
    %32 = vector.load %arg6[%c0_24, %c3] : memref<4x16xf32, #tpu.memory_space<vmem>>, vector<2x1xf32>
    tpu.vector_store %arg6[%c0_24, %c3], %31 {strides = array<i32>} : memref<4x16xf32, #tpu.memory_space<vmem>>, vector<2x1xf32>,
    %cst_25 = arith.constant dense<0xFF800000> : vector<2xf32>
    %33 = vector.multi_reduction <maximumf>, %27, %cst_25 [1] : vector<2x48xf32> to vector<2xf32>
    %34 = vector.shape_cast %33 : vector<2xf32> to vector<2x1xf32>
    %c2_26 = arith.constant 2 : index
    %c3_27 = arith.constant 3 : index
    %35 = vector.load %arg6[%c2_26, %c3_27] : memref<4x16xf32, #tpu.memory_space<vmem>>, vector<2x1xf32>
    tpu.vector_store %arg6[%c2_26, %c3_27], %34 {strides = array<i32>} : memref<4x16xf32, #tpu.memory_space<vmem>>, vector<2x1xf32>,
    %c0_28 = arith.constant 0 : index
    %c192 = arith.constant 192 : index
    %36 = vector.load %arg1[%c0_28, %c192] : memref<2x768xf32, #tpu.memory_space<vmem>>, vector<2x48xf32>
    %cst_29 = arith.constant dense<0.000000e+00> : vector<2xf32>
    %37 = vector.multi_reduction <add>, %36, %cst_29 [1] : vector<2x48xf32> to vector<2xf32>
    %38 = vector.shape_cast %37 : vector<2xf32> to vector<2x1xf32>
    %cst_30 = arith.constant 4.800000e+01 : f32
    %39 = vector.broadcast %cst_30 : f32 to vector<2x1xf32>
    %40 = arith.divf %38, %39 : vector<2x1xf32>
    %c0_31 = arith.constant 0 : index
    %c4 = arith.constant 4 : index
    %41 = vector.load %arg6[%c0_31, %c4] : memref<4x16xf32, #tpu.memory_space<vmem>>, vector<2x1xf32>
    tpu.vector_store %arg6[%c0_31, %c4], %40 {strides = array<i32>} : memref<4x16xf32, #tpu.memory_space<vmem>>, vector<2x1xf32>,
    %cst_32 = arith.constant dense<0xFF800000> : vector<2xf32>
    %42 = vector.multi_reduction <maximumf>, %36, %cst_32 [1] : vector<2x48xf32> to vector<2xf32>
    %43 = vector.shape_cast %42 : vector<2xf32> to vector<2x1xf32>
    %c2_33 = arith.constant 2 : index
    %c4_34 = arith.constant 4 : index
    %44 = vector.load %arg6[%c2_33, %c4_34] : memref<4x16xf32, #tpu.memory_space<vmem>>, vector<2x1xf32>
    tpu.vector_store %arg6[%c2_33, %c4_34], %43 {strides = array<i32>} : memref<4x16xf32, #tpu.memory_space<vmem>>, vector<2x1xf32>,
    %c0_35 = arith.constant 0 : index
    %c240 = arith.constant 240 : index
    %45 = vector.load %arg1[%c0_35, %c240] : memref<2x768xf32, #tpu.memory_space<vmem>>, vector<2x48xf32>
    %cst_36 = arith.constant dense<0.000000e+00> : vector<2xf32>
    %46 = vector.multi_reduction <add>, %45, %cst_36 [1] : vector<2x48xf32> to vector<2xf32>
    %47 = vector.shape_cast %46 : vector<2xf32> to vector<2x1xf32>
    %cst_37 = arith.constant 4.800000e+01 : f32
    %48 = vector.broadcast %cst_37 : f32 to vector<2x1xf32>
    %49 = arith.divf %47, %48 : vector<2x1xf32>
    %c0_38 = arith.constant 0 : index
    %c5 = arith.constant 5 : index
    %50 = vector.load %arg6[%c0_38, %c5] : memref<4x16xf32, #tpu.memory_space<vmem>>, vector<2x1xf32>
    tpu.vector_store %arg6[%c0_38, %c5], %49 {strides = array<i32>} : memref<4x16xf32, #tpu.memory_space<vmem>>, vector<2x1xf32>,
    %cst_39 = arith.constant dense<0xFF800000> : vector<2xf32>
    %51 = vector.multi_reduction <maximumf>, %45, %cst_39 [1] : vector<2x48xf32> to vector<2xf32>
    %52 = vector.shape_cast %51 : vector<2xf32> to vector<2x1xf32>
    %c2_40 = arith.constant 2 : index
    %c5_41 = arith.constant 5 : index
    %53 = vector.load %arg6[%c2_40, %c5_41] : memref<4x16xf32, #tpu.memory_space<vmem>>, vector<2x1xf32>
    tpu.vector_store %arg6[%c2_40, %c5_41], %52 {strides = array<i32>} : memref<4x16xf32, #tpu.memory_space<vmem>>, vector<2x1xf32>,
    %c0_42 = arith.constant 0 : index
    %c288 = arith.constant 288 : index
    %54 = vector.load %arg1[%c0_42, %c288] : memref<2x768xf32, #tpu.memory_space<vmem>>, vector<2x48xf32>
    %cst_43 = arith.constant dense<0.000000e+00> : vector<2xf32>
    %55 = vector.multi_reduction <add>, %54, %cst_43 [1] : vector<2x48xf32> to vector<2xf32>
    %56 = vector.shape_cast %55 : vector<2xf32> to vector<2x1xf32>
    %cst_44 = arith.constant 4.800000e+01 : f32
    %57 = vector.broadcast %cst_44 : f32 to vector<2x1xf32>
    %58 = arith.divf %56, %57 : vector<2x1xf32>
    %c0_45 = arith.constant 0 : index
    %c6 = arith.constant 6 : index
    %59 = vector.load %arg6[%c0_45, %c6] : memref<4x16xf32, #tpu.memory_space<vmem>>, vector<2x1xf32>
    tpu.vector_store %arg6[%c0_45, %c6], %58 {strides = array<i32>} : memref<4x16xf32, #tpu.memory_space<vmem>>, vector<2x1xf32>,
    %cst_46 = arith.constant dense<0xFF800000> : vector<2xf32>
    %60 = vector.multi_reduction <maximumf>, %54, %cst_46 [1] : vector<2x48xf32> to vector<2xf32>
    %61 = vector.shape_cast %60 : vector<2xf32> to vector<2x1xf32>
    %c2_47 = arith.constant 2 : index
    %c6_48 = arith.constant 6 : index
    %62 = vector.load %arg6[%c2_47, %c6_48] : memref<4x16xf32, #tpu.memory_space<vmem>>, vector<2x1xf32>
    tpu.vector_store %arg6[%c2_47, %c6_48], %61 {strides = array<i32>} : memref<4x16xf32, #tpu.memory_space<vmem>>, vector<2x1xf32>,
    %c0_49 = arith.constant 0 : index
    %c336 = arith.constant 336 : index
    %63 = vector.load %arg1[%c0_49, %c336] : memref<2x768xf32, #tpu.memory_space<vmem>>, vector<2x48xf32>
    %cst_50 = arith.constant dense<0.000000e+00> : vector<2xf32>
    %64 = vector.multi_reduction <add>, %63, %cst_50 [1] : vector<2x48xf32> to vector<2xf32>
    %65 = vector.shape_cast %64 : vector<2xf32> to vector<2x1xf32>
    %cst_51 = arith.constant 4.800000e+01 : f32
    %66 = vector.broadcast %cst_51 : f32 to vector<2x1xf32>
    %67 = arith.divf %65, %66 : vector<2x1xf32>
    %c0_52 = arith.constant 0 : index
    %c7 = arith.constant 7 : index
    %68 = vector.load %arg6[%c0_52, %c7] : memref<4x16xf32, #tpu.memory_space<vmem>>, vector<2x1xf32>
    tpu.vector_store %arg6[%c0_52, %c7], %67 {strides = array<i32>} : memref<4x16xf32, #tpu.memory_space<vmem>>, vector<2x1xf32>,
    %cst_53 = arith.constant dense<0xFF800000> : vector<2xf32>
    %69 = vector.multi_reduction <maximumf>, %63, %cst_53 [1] : vector<2x48xf32> to vector<2xf32>
    %70 = vector.shape_cast %69 : vector<2xf32> to vector<2x1xf32>
    %c2_54 = arith.constant 2 : index
    %c7_55 = arith.constant 7 : index
    %71 = vector.load %arg6[%c2_54, %c7_55] : memref<4x16xf32, #tpu.memory_space<vmem>>, vector<2x1xf32>
    tpu.vector_store %arg6[%c2_54, %c7_55], %70 {strides = array<i32>} : memref<4x16xf32, #tpu.memory_space<vmem>>, vector<2x1xf32>,
    %c0_56 = arith.constant 0 : index
    %c384 = arith.constant 384 : index
    %72 = vector.load %arg1[%c0_56, %c384] : memref<2x768xf32, #tpu.memory_space<vmem>>, vector<2x48xf32>
    %cst_57 = arith.constant dense<0.000000e+00> : vector<2xf32>
    %73 = vector.multi_reduction <add>, %72, %cst_57 [1] : vector<2x48xf32> to vector<2xf32>
    %74 = vector.shape_cast %73 : vector<2xf32> to vector<2x1xf32>
    %cst_58 = arith.constant 4.800000e+01 : f32
    %75 = vector.broadcast %cst_58 : f32 to vector<2x1xf32>
    %76 = arith.divf %74, %75 : vector<2x1xf32>
    %c0_59 = arith.constant 0 : index
    %c8 = arith.constant 8 : index
    %77 = vector.load %arg6[%c0_59, %c8] : memref<4x16xf32, #tpu.memory_space<vmem>>, vector<2x1xf32>
    tpu.vector_store %arg6[%c0_59, %c8], %76 {strides = array<i32>} : memref<4x16xf32, #tpu.memory_space<vmem>>, vector<2x1xf32>,
    %cst_60 = arith.constant dense<0xFF800000> : vector<2xf32>
    %78 = vector.multi_reduction <maximumf>, %72, %cst_60 [1] : vector<2x48xf32> to vector<2xf32>
    %79 = vector.shape_cast %78 : vector<2xf32> to vector<2x1xf32>
    %c2_61 = arith.constant 2 : index
    %c8_62 = arith.constant 8 : index
    %80 = vector.load %arg6[%c2_61, %c8_62] : memref<4x16xf32, #tpu.memory_space<vmem>>, vector<2x1xf32>
    tpu.vector_store %arg6[%c2_61, %c8_62], %79 {strides = array<i32>} : memref<4x16xf32, #tpu.memory_space<vmem>>, vector<2x1xf32>,
    %c0_63 = arith.constant 0 : index
    %c432 = arith.constant 432 : index
    %81 = vector.load %arg1[%c0_63, %c432] : memref<2x768xf32, #tpu.memory_space<vmem>>, vector<2x48xf32>
    %cst_64 = arith.constant dense<0.000000e+00> : vector<2xf32>
    %82 = vector.multi_reduction <add>, %81, %cst_64 [1] : vector<2x48xf32> to vector<2xf32>
    %83 = vector.shape_cast %82 : vector<2xf32> to vector<2x1xf32>
    %cst_65 = arith.constant 4.800000e+01 : f32
    %84 = vector.broadcast %cst_65 : f32 to vector<2x1xf32>
    %85 = arith.divf %83, %84 : vector<2x1xf32>
    %c0_66 = arith.constant 0 : index
    %c9 = arith.constant 9 : index
    %86 = vector.load %arg6[%c0_66, %c9] : memref<4x16xf32, #tpu.memory_space<vmem>>, vector<2x1xf32>
    tpu.vector_store %arg6[%c0_66, %c9], %85 {strides = array<i32>} : memref<4x16xf32, #tpu.memory_space<vmem>>, vector<2x1xf32>,
    %cst_67 = arith.constant dense<0xFF800000> : vector<2xf32>
    %87 = vector.multi_reduction <maximumf>, %81, %cst_67 [1] : vector<2x48xf32> to vector<2xf32>
    %88 = vector.shape_cast %87 : vector<2xf32> to vector<2x1xf32>
    %c2_68 = arith.constant 2 : index
    %c9_69 = arith.constant 9 : index
    %89 = vector.load %arg6[%c2_68, %c9_69] : memref<4x16xf32, #tpu.memory_space<vmem>>, vector<2x1xf32>
    tpu.vector_store %arg6[%c2_68, %c9_69], %88 {strides = array<i32>} : memref<4x16xf32, #tpu.memory_space<vmem>>, vector<2x1xf32>,
    %c0_70 = arith.constant 0 : index
    %c480 = arith.constant 480 : index
    %90 = vector.load %arg1[%c0_70, %c480] : memref<2x768xf32, #tpu.memory_space<vmem>>, vector<2x48xf32>
    %cst_71 = arith.constant dense<0.000000e+00> : vector<2xf32>
    %91 = vector.multi_reduction <add>, %90, %cst_71 [1] : vector<2x48xf32> to vector<2xf32>
    %92 = vector.shape_cast %91 : vector<2xf32> to vector<2x1xf32>
    %cst_72 = arith.constant 4.800000e+01 : f32
    %93 = vector.broadcast %cst_72 : f32 to vector<2x1xf32>
    %94 = arith.divf %92, %93 : vector<2x1xf32>
    %c0_73 = arith.constant 0 : index
    %c10 = arith.constant 10 : index
    %95 = vector.load %arg6[%c0_73, %c10] : memref<4x16xf32, #tpu.memory_space<vmem>>, vector<2x1xf32>
    tpu.vector_store %arg6[%c0_73, %c10], %94 {strides = array<i32>} : memref<4x16xf32, #tpu.memory_space<vmem>>, vector<2x1xf32>,
    %cst_74 = arith.constant dense<0xFF800000> : vector<2xf32>
    %96 = vector.multi_reduction <maximumf>, %90, %cst_74 [1] : vector<2x48xf32> to vector<2xf32>
    %97 = vector.shape_cast %96 : vector<2xf32> to vector<2x1xf32>
    %c2_75 = arith.constant 2 : index
    %c10_76 = arith.constant 10 : index
    %98 = vector.load %arg6[%c2_75, %c10_76] : memref<4x16xf32, #tpu.memory_space<vmem>>, vector<2x1xf32>
    tpu.vector_store %arg6[%c2_75, %c10_76], %97 {strides = array<i32>} : memref<4x16xf32, #tpu.memory_space<vmem>>, vector<2x1xf32>,
    %c0_77 = arith.constant 0 : index
    %c528 = arith.constant 528 : index
    %99 = vector.load %arg1[%c0_77, %c528] : memref<2x768xf32, #tpu.memory_space<vmem>>, vector<2x48xf32>
    %cst_78 = arith.constant dense<0.000000e+00> : vector<2xf32>
    %100 = vector.multi_reduction <add>, %99, %cst_78 [1] : vector<2x48xf32> to vector<2xf32>
    %101 = vector.shape_cast %100 : vector<2xf32> to vector<2x1xf32>
    %cst_79 = arith.constant 4.800000e+01 : f32
    %102 = vector.broadcast %cst_79 : f32 to vector<2x1xf32>
    %103 = arith.divf %101, %102 : vector<2x1xf32>
    %c0_80 = arith.constant 0 : index
    %c11 = arith.constant 11 : index
    %104 = vector.load %arg6[%c0_80, %c11] : memref<4x16xf32, #tpu.memory_space<vmem>>, vector<2x1xf32>
    tpu.vector_store %arg6[%c0_80, %c11], %103 {strides = array<i32>} : memref<4x16xf32, #tpu.memory_space<vmem>>, vector<2x1xf32>,
    %cst_81 = arith.constant dense<0xFF800000> : vector<2xf32>
    %105 = vector.multi_reduction <maximumf>, %99, %cst_81 [1] : vector<2x48xf32> to vector<2xf32>
    %106 = vector.shape_cast %105 : vector<2xf32> to vector<2x1xf32>
    %c2_82 = arith.constant 2 : index
    %c11_83 = arith.constant 11 : index
    %107 = vector.load %arg6[%c2_82, %c11_83] : memref<4x16xf32, #tpu.memory_space<vmem>>, vector<2x1xf32>
    tpu.vector_store %arg6[%c2_82, %c11_83], %106 {strides = array<i32>} : memref<4x16xf32, #tpu.memory_space<vmem>>, vector<2x1xf32>,
    %c0_84 = arith.constant 0 : index
    %c576 = arith.constant 576 : index
    %108 = vector.load %arg1[%c0_84, %c576] : memref<2x768xf32, #tpu.memory_space<vmem>>, vector<2x48xf32>
    %cst_85 = arith.constant dense<0.000000e+00> : vector<2xf32>
    %109 = vector.multi_reduction <add>, %108, %cst_85 [1] : vector<2x48xf32> to vector<2xf32>
    %110 = vector.shape_cast %109 : vector<2xf32> to vector<2x1xf32>
    %cst_86 = arith.constant 4.800000e+01 : f32
    %111 = vector.broadcast %cst_86 : f32 to vector<2x1xf32>
    %112 = arith.divf %110, %111 : vector<2x1xf32>
    %c0_87 = arith.constant 0 : index
    %c12 = arith.constant 12 : index
    %113 = vector.load %arg6[%c0_87, %c12] : memref<4x16xf32, #tpu.memory_space<vmem>>, vector<2x1xf32>
    tpu.vector_store %arg6[%c0_87, %c12], %112 {strides = array<i32>} : memref<4x16xf32, #tpu.memory_space<vmem>>, vector<2x1xf32>,
    %cst_88 = arith.constant dense<0xFF800000> : vector<2xf32>
    %114 = vector.multi_reduction <maximumf>, %108, %cst_88 [1] : vector<2x48xf32> to vector<2xf32>
    %115 = vector.shape_cast %114 : vector<2xf32> to vector<2x1xf32>
    %c2_89 = arith.constant 2 : index
    %c12_90 = arith.constant 12 : index
    %116 = vector.load %arg6[%c2_89, %c12_90] : memref<4x16xf32, #tpu.memory_space<vmem>>, vector<2x1xf32>
    tpu.vector_store %arg6[%c2_89, %c12_90], %115 {strides = array<i32>} : memref<4x16xf32, #tpu.memory_space<vmem>>, vector<2x1xf32>,
    %c0_91 = arith.constant 0 : index
    %c624 = arith.constant 624 : index
    %117 = vector.load %arg1[%c0_91, %c624] : memref<2x768xf32, #tpu.memory_space<vmem>>, vector<2x48xf32>
    %cst_92 = arith.constant dense<0.000000e+00> : vector<2xf32>
    %118 = vector.multi_reduction <add>, %117, %cst_92 [1] : vector<2x48xf32> to vector<2xf32>
    %119 = vector.shape_cast %118 : vector<2xf32> to vector<2x1xf32>
    %cst_93 = arith.constant 4.800000e+01 : f32
    %120 = vector.broadcast %cst_93 : f32 to vector<2x1xf32>
    %121 = arith.divf %119, %120 : vector<2x1xf32>
    %c0_94 = arith.constant 0 : index
    %c13 = arith.constant 13 : index
    %122 = vector.load %arg6[%c0_94, %c13] : memref<4x16xf32, #tpu.memory_space<vmem>>, vector<2x1xf32>
    tpu.vector_store %arg6[%c0_94, %c13], %121 {strides = array<i32>} : memref<4x16xf32, #tpu.memory_space<vmem>>, vector<2x1xf32>,
    %cst_95 = arith.constant dense<0xFF800000> : vector<2xf32>
    %123 = vector.multi_reduction <maximumf>, %117, %cst_95 [1] : vector<2x48xf32> to vector<2xf32>
    %124 = vector.shape_cast %123 : vector<2xf32> to vector<2x1xf32>
    %c2_96 = arith.constant 2 : index
    %c13_97 = arith.constant 13 : index
    %125 = vector.load %arg6[%c2_96, %c13_97] : memref<4x16xf32, #tpu.memory_space<vmem>>, vector<2x1xf32>
    tpu.vector_store %arg6[%c2_96, %c13_97], %124 {strides = array<i32>} : memref<4x16xf32, #tpu.memory_space<vmem>>, vector<2x1xf32>,
    %c0_98 = arith.constant 0 : index
    %c672 = arith.constant 672 : index
    %126 = vector.load %arg1[%c0_98, %c672] : memref<2x768xf32, #tpu.memory_space<vmem>>, vector<2x48xf32>
    %cst_99 = arith.constant dense<0.000000e+00> : vector<2xf32>
    %127 = vector.multi_reduction <add>, %126, %cst_99 [1] : vector<2x48xf32> to vector<2xf32>
    %128 = vector.shape_cast %127 : vector<2xf32> to vector<2x1xf32>
    %cst_100 = arith.constant 4.800000e+01 : f32
    %129 = vector.broadcast %cst_100 : f32 to vector<2x1xf32>
    %130 = arith.divf %128, %129 : vector<2x1xf32>
    %c0_101 = arith.constant 0 : index
    %c14 = arith.constant 14 : index
    %131 = vector.load %arg6[%c0_101, %c14] : memref<4x16xf32, #tpu.memory_space<vmem>>, vector<2x1xf32>
    tpu.vector_store %arg6[%c0_101, %c14], %130 {strides = array<i32>} : memref<4x16xf32, #tpu.memory_space<vmem>>, vector<2x1xf32>,
    %cst_102 = arith.constant dense<0xFF800000> : vector<2xf32>
    %132 = vector.multi_reduction <maximumf>, %126, %cst_102 [1] : vector<2x48xf32> to vector<2xf32>
    %133 = vector.shape_cast %132 : vector<2xf32> to vector<2x1xf32>
    %c2_103 = arith.constant 2 : index
    %c14_104 = arith.constant 14 : index
    %134 = vector.load %arg6[%c2_103, %c14_104] : memref<4x16xf32, #tpu.memory_space<vmem>>, vector<2x1xf32>
    tpu.vector_store %arg6[%c2_103, %c14_104], %133 {strides = array<i32>} : memref<4x16xf32, #tpu.memory_space<vmem>>, vector<2x1xf32>,
    %c0_105 = arith.constant 0 : index
    %c720 = arith.constant 720 : index
    %135 = vector.load %arg1[%c0_105, %c720] : memref<2x768xf32, #tpu.memory_space<vmem>>, vector<2x48xf32>
    %cst_106 = arith.constant dense<0.000000e+00> : vector<2xf32>
    %136 = vector.multi_reduction <add>, %135, %cst_106 [1] : vector<2x48xf32> to vector<2xf32>
    %137 = vector.shape_cast %136 : vector<2xf32> to vector<2x1xf32>
    %cst_107 = arith.constant 4.800000e+01 : f32
    %138 = vector.broadcast %cst_107 : f32 to vector<2x1xf32>
    %139 = arith.divf %137, %138 : vector<2x1xf32>
    %c0_108 = arith.constant 0 : index
    %c15 = arith.constant 15 : index
    %140 = vector.load %arg6[%c0_108, %c15] : memref<4x16xf32, #tpu.memory_space<vmem>>, vector<2x1xf32>
    tpu.vector_store %arg6[%c0_108, %c15], %139 {strides = array<i32>} : memref<4x16xf32, #tpu.memory_space<vmem>>, vector<2x1xf32>,
    %cst_109 = arith.constant dense<0xFF800000> : vector<2xf32>
    %141 = vector.multi_reduction <maximumf>, %135, %cst_109 [1] : vector<2x48xf32> to vector<2xf32>
    %142 = vector.shape_cast %141 : vector<2xf32> to vector<2x1xf32>
    %c2_110 = arith.constant 2 : index
    %c15_111 = arith.constant 15 : index
    %143 = vector.load %arg6[%c2_110, %c15_111] : memref<4x16xf32, #tpu.memory_space<vmem>>, vector<2x1xf32>
    tpu.vector_store %arg6[%c2_110, %c15_111], %142 {strides = array<i32>} : memref<4x16xf32, #tpu.memory_space<vmem>>, vector<2x1xf32>,
    %c0_112 = arith.constant 0 : index
    %c0_113 = arith.constant 0 : index
    %144 = vector.load %arg6[%c0_112, %c0_113] : memref<4x16xf32, #tpu.memory_space<vmem>>, vector<4x16xf32>
    %c0_114 = arith.constant 0 : index
    %c0_115 = arith.constant 0 : index
    %145 = vector.load %arg2[%c0_114, %c0_115] : memref<16x4xf32, #tpu.memory_space<vmem>>, vector<16x4xf32>
    %cst_116 = arith.constant dense<0.000000e+00> : vector<4x4xf32>
    %146 = tpu.matmul %144, %145, %cst_116 {dimension_numbers = #tpu.dot_dimension_numbers<[1], [0], [0], [1], [0, 0, 1, 1], [], []>} : vector<4x16xf32>, vector<16x4xf32>, vector<4x4xf32> -> vector<4x4xf32>
    %cst_117 = arith.constant 0.000000e+00 : f32
    %147 = vector.broadcast %cst_117 : f32 to vector<4x4xf32>
    %148 = arith.maximumf %146, %147 : vector<4x4xf32>
    %c0_118 = arith.constant 0 : index
    %c0_119 = arith.constant 0 : index
    %149 = vector.load %arg3[%c0_118, %c0_119] : memref<4x16xf32, #tpu.memory_space<vmem>>, vector<4x16xf32>
    %cst_120 = arith.constant dense<0.000000e+00> : vector<4x16xf32>
    %150 = tpu.matmul %148, %149, %cst_120 {dimension_numbers = #tpu.dot_dimension_numbers<[1], [0], [0], [1], [0, 0, 1, 1], [], []>} : vector<4x4xf32>, vector<4x16xf32>, vector<4x16xf32> -> vector<4x16xf32>
    %c0_121 = arith.constant 0 : index
    %c0_122 = arith.constant 0 : index
    %151 = vector.load %arg6[%c0_121, %c0_122] : memref<4x16xf32, #tpu.memory_space<vmem>>, vector<4x16xf32>
    tpu.vector_store %arg6[%c0_121, %c0_122], %150 {strides = array<i32>} : memref<4x16xf32, #tpu.memory_space<vmem>>, vector<4x16xf32>,
    %c0_123 = arith.constant 0 : index
    %c0_124 = arith.constant 0 : index
    %152 = vector.load %arg6[%c0_123, %c0_124] : memref<4x16xf32, #tpu.memory_space<vmem>>, vector<2x16xf32>
    %c2_125 = arith.constant 2 : index
    %c0_126 = arith.constant 0 : index
    %153 = vector.load %arg6[%c2_125, %c0_126] : memref<4x16xf32, #tpu.memory_space<vmem>>, vector<2x16xf32>
    %154 = arith.addf %152, %153 : vector<2x16xf32>
    %155 = arith.negf %154 : vector<2x16xf32>
    %156 = math.exp %155 : vector<2x16xf32>
    %cst_127 = arith.constant 1.000000e+00 : f32
    %157 = vector.broadcast %cst_127 : f32 to vector<2x16xf32>
    %158 = arith.addf %157, %156 : vector<2x16xf32>
    %159 = arith.divf %157, %158 : vector<2x16xf32>
    %c0_128 = arith.constant 0 : index
    %c0_129 = arith.constant 0 : index
    %160 = vector.load %arg4[%c0_128, %c0_129] : memref<16x768xf32, #tpu.memory_space<vmem>>, vector<16x768xf32>
    %cst_130 = arith.constant dense<0.000000e+00> : vector<2x768xf32>
    %161 = tpu.matmul %159, %160, %cst_130 {dimension_numbers = #tpu.dot_dimension_numbers<[1], [0], [0], [1], [0, 0, 1, 1], [], []>} : vector<2x16xf32>, vector<16x768xf32>, vector<2x768xf32> -> vector<2x768xf32>
    %c0_131 = arith.constant 0 : index
    %c0_132 = arith.constant 0 : index
    %162 = vector.load %arg1[%c0_131, %c0_132] : memref<2x768xf32, #tpu.memory_space<vmem>>, vector<2x768xf32>
    %163 = arith.mulf %161, %162 : vector<2x768xf32>
    %c0_133 = arith.constant 0 : index
    %c0_134 = arith.constant 0 : index
    %164 = vector.load %arg5[%c0_133, %c0_134] : memref<2x768xf32, #tpu.memory_space<vmem>>, vector<2x768xf32>
    tpu.vector_store %arg5[%c0_133, %c0_134], %163 {strides = array<i32>} : memref<2x768xf32, #tpu.memory_space<vmem>>, vector<2x768xf32>,
    return
  }
  func.func @transform_0(%arg0: i32) -> (i32, i32) {
    %c0_i32 = arith.constant 0 : i32
    %c0_i32_0 = arith.constant 0 : i32
    return %arg0, %c0_i32 : i32, i32
  }
  func.func @transform_1(%arg0: i32) -> (i32, i32) {
    %c0_i32 = arith.constant 0 : i32
    %c0_i32_0 = arith.constant 0 : i32
    %c0_i32_1 = arith.constant 0 : i32
    return %c0_i32, %c0_i32_0 : i32, i32
  }
  func.func @transform_2(%arg0: i32) -> (i32, i32) {
    %c0_i32 = arith.constant 0 : i32
    %c0_i32_0 = arith.constant 0 : i32
    %c0_i32_1 = arith.constant 0 : i32
    return %c0_i32, %c0_i32_0 : i32, i32
  }
  func.func @transform_3(%arg0: i32) -> (i32, i32) {
    %c0_i32 = arith.constant 0 : i32
    %c0_i32_0 = arith.constant 0 : i32
    %c0_i32_1 = arith.constant 0 : i32
    return %c0_i32, %c0_i32_0 : i32, i32
  }
  func.func @transform_4(%arg0: i32) -> (i32, i32) {
    %c0_i32 = arith.constant 0 : i32
    %c0_i32_0 = arith.constant 0 : i32
    return %arg0, %c0_i32 : i32, i32
  }
}

</mosaic_0001>

<llo_original>
// kernel: lfam_forward.1
$region0: #{lfam_forward.1}
  #allocation0 [shape = 'u32[]', space=smem, size = 0x4, offset = 0x4, fixed_abs, tag = 'smem constant byte address 0x4 - core index']
  #allocation1 [shape = 'u32[144,128]{1,0:T(1,128)}', space=vmem, size = 0x12000, scoped, tag = 'internal scratch']
  #allocation2 [shape = 'f32[4,16]{1,0:T(4,128)}', space=vmem, size = 0x800, scoped, tag = 'scratch operand']
  %s0 = inlined_call_operand.vmem [shape: f32[2,768], index: 0, kind: input, shape index: {}]
  %s1 = inlined_call_operand.vmem [shape: f32[16,4], index: 1, kind: input, shape index: {}]
  %s2 = inlined_call_operand.vmem [shape: f32[4,16], index: 2, kind: input, shape index: {}]
  %s3 = inlined_call_operand.vmem [shape: f32[16,768], index: 3, kind: input, shape index: {}]
  %s4 = inlined_call_operand.vmem [shape: f32[2,768], index: 4, kind: output, shape index: {}]
  %s5 = sld [smem:[#allocation0]]
  $region26: #{lfam_forward.1} parent=0
    _
  %s7 = ssub.s32 1, %s5
  %s8 = scalar_select 0, %s7, %s5
  // Predicated region
  $region2: #{lfam_forward.1} parent=0 // pred_check
    _
  $region3: #{lfam_forward.1} parent=0 // pred_check_branch
    %10 = sbr.rel (0) target = $region5
  $region4: #{lfam_forward.1} parent=0 // pred_region
    _
  $region5: #{lfam_forward.1} parent=0 // pred_fallthru
    _
  // Predicated region
  $region6: #{lfam_forward.1} parent=0 // pred_check
    _
  $region7: #{lfam_forward.1} parent=0 // pred_check_branch
    %12 = sbr.rel (0) target = $region9
  $region8: #{lfam_forward.1} parent=0 // pred_region
    _
  $region9: #{lfam_forward.1} parent=0 // pred_fallthru
    _
  // Predicated region
  $region10: #{lfam_forward.1} parent=0 // pred_check
    _
  $region11: #{lfam_forward.1} parent=0 // pred_check_branch
    %14 = sbr.rel (0) target = $region13
  $region12: #{lfam_forward.1} parent=0 // pred_region
    _
  $region13: #{lfam_forward.1} parent=0 // pred_fallthru
    _
  // Predicated region
  $region14: #{lfam_forward.1} parent=0 // pred_check
    _
  $region15: #{lfam_forward.1} parent=0 // pred_check_branch
    %16 = sbr.rel (0) target = $region17
  $region16: #{lfam_forward.1} parent=0 // pred_region
    _
  $region17: #{lfam_forward.1} parent=0 // pred_fallthru
    _
  %v17 = vld [vmem:[%s0] sm:$0x3]
  %vm18 = vcmask 386048
  %v19 = vsel %vm18, %v17, 0.0
  %20 = vadd.xlane.f32.xlu0 %v19
  %v21 = vpop.xlane.xlu0 %20
  %v22 = vrcp.pop 48.0
  %v23 = vmul.f32 %v21, %v22
  %vm24 = vcmask 1024
  %25 = vst.msk [vmem:[#allocation2] sm:$0x3] %vm24, %v23
  %v26 = vsel %vm18, %v17, -inf
  %27 = vmax.xlane.f32.xlu0 %v26
  %v28 = vpop.xlane.xlu0 %27
  %29 = vst.msk [vmem:[#allocation2 + $0x2] sm:$0x3] %vm24, %v28
  %v30 = vld [vmem:[%s0] sm:$0x3]
  %v33 = vunpack.c.l.s4 1983009808
  %v34 = vunpack.c.0.s8 %v33
  %v35 = vlaneseq
  %v36 = vshrl.u32 %v35, 7
  %v37 = vsub.s32 %v34, %v36
  %v38 = vrot.slane %v30, %v37
  %39 = vrot.lane.b32.xlu0 %v38, 80
  %v40 = vpop.permute.xlu0 %39
  %v42 = vsel %vm18, %v40, 0.0
  %43 = vadd.xlane.f32.xlu0 %v42
  %v44 = vpop.xlane.xlu0 %43
  %v45 = vmul.f32 %v44, %v22
  %vm46 = vcmask 9224
  %47 = vst.msk [vmem:[#allocation2] sm:$0x3] %vm46, %v45
  %vm48 = vcmask 779648
  %v49 = vsel %vm48, %v30, -inf
  %50 = vmax.xlane.f32.xlu0 %v49
  %v51 = vpop.xlane.xlu0 %50
  %52 = vst.msk [vmem:[#allocation2 + $0x2] sm:$0x3] %vm46, %v51
  %v53 = vld [vmem:[%s0] sm:$0xf]
  %v56 = vunpack.c.l.s4 1983009808
  %v57 = vunpack.c.0.s8 %v56
  %v58 = vlaneseq
  %v59 = vshrl.u32 %v58, 7
  %v60 = vsub.s32 %v57, %v59
  %v61 = vrot.slane %v53, %v60
  %v62 = vcombine.high %v61, %v61
  %63 = vrot.lane.b32.xlu0 %v61, 32
  %v64 = vpop.permute.xlu0 %63
  %65 = vrot.lane.b32.xlu0 %v62, 32
  %v66 = vpop.permute.xlu0 %65
  %vm67 = vcmask 261120
  %v68 = vsel %vm67, %v64, %v66
  %v70 = vsel %vm18, %v68, 0.0
  %71 = vadd.xlane.f32.xlu0 %v70
  %v72 = vpop.xlane.xlu0 %71
  %v73 = vmul.f32 %v72, %v22
  %vm74 = vcmask 17424
  %75 = vst.msk [vmem:[#allocation2] sm:$0x3] %vm74, %v73
  %vm78 = vcmask 1042176
  %v79 = vsel %vm78, %v61, -inf
  %vm80 = vcmask 123904
  %v81 = vsel %vm80, %v62, -inf
  %v82 = vmax.f32 %v79, %v81
  %83 = vmax.xlane.f32.xlu0 %v82
  %v84 = vpop.xlane.xlu0 %83
  %85 = vst.msk [vmem:[#allocation2 + $0x2] sm:$0x3] %vm74, %v84
  %v86 = vld [vmem:[%s0 + $0x2] sm:$0x3]
  %v89 = vunpack.c.l.s4 1983009808
  %v90 = vunpack.c.0.s8 %v89
  %v91 = vlaneseq
  %v92 = vshrl.u32 %v91, 7
  %v93 = vsub.s32 %v90, %v92
  %v94 = vrot.slane %v86, %v93
  %95 = vrot.lane.b32.xlu0 %v94, 112
  %v96 = vpop.permute.xlu0 %95
  %v98 = vsel %vm18, %v96, 0.0
  %99 = vadd.xlane.f32.xlu0 %v98
  %v100 = vpop.xlane.xlu0 %99
  %v101 = vmul.f32 %v100, %v22
  %vm102 = vcmask 25624
  %103 = vst.msk [vmem:[#allocation2] sm:$0x3] %vm102, %v101
  %vm104 = vcmask 517248
  %v105 = vsel %vm104, %v86, -inf
  %106 = vmax.xlane.f32.xlu0 %v105
  %v107 = vpop.xlane.xlu0 %106
  %108 = vst.msk [vmem:[#allocation2 + $0x2] sm:$0x3] %vm102, %v107
  %v109 = vld [vmem:[%s0 + $0x2] sm:$0x3]
  %v112 = vunpack.c.l.s4 1983009808
  %v113 = vunpack.c.0.s8 %v112
  %v114 = vlaneseq
  %v115 = vshrl.u32 %v114, 7
  %v116 = vsub.s32 %v113, %v115
  %v117 = vrot.slane %v109, %v116
  %118 = vrot.lane.b32.xlu0 %v117, 64
  %v119 = vpop.permute.xlu0 %118
  %v121 = vsel %vm18, %v119, 0.0
  %122 = vadd.xlane.f32.xlu0 %v121
  %v123 = vpop.xlane.xlu0 %122
  %v124 = vmul.f32 %v123, %v22
  %vm125 = vcmask 33824
  %126 = vst.msk [vmem:[#allocation2] sm:$0x3] %vm125, %v124
  %vm127 = vcmask 910848
  %v128 = vsel %vm127, %v109, -inf
  %129 = vmax.xlane.f32.xlu0 %v128
  %v130 = vpop.xlane.xlu0 %129
  %131 = vst.msk [vmem:[#allocation2 + $0x2] sm:$0x3] %vm125, %v130
  %v132 = vld [vmem:[%s0 + $0x2] sm:$0xf]
  %v135 = vunpack.c.l.s4 1983009808
  %v136 = vunpack.c.0.s8 %v135
  %v137 = vlaneseq
  %v138 = vshrl.u32 %v137, 7
  %v139 = vsub.s32 %v136, %v138
  %v140 = vrot.slane %v132, %v139
  %v141 = vcombine.high %v140, %v140
  %142 = vrot.lane.b32.xlu0 %v140, 16
  %v143 = vpop.permute.xlu0 %142
  %144 = vrot.lane.b32.xlu0 %v141, 16
  %v145 = vpop.permute.xlu0 %144
  %vm146 = vcmask 130048
  %v147 = vsel %vm146, %v143, %v145
  %v149 = vsel %vm18, %v147, 0.0
  %150 = vadd.xlane.f32.xlu0 %v149
  %v151 = vpop.xlane.xlu0 %150
  %v152 = vmul.f32 %v151, %v22
  %vm153 = vcmask 42024
  %154 = vst.msk [vmem:[#allocation2] sm:$0x3] %vm153, %v152
  %vm157 = vcmask 1042304
  %v158 = vsel %vm157, %v140, -inf
  %vm159 = vcmask 254976
  %v160 = vsel %vm159, %v141, -inf
  %v161 = vmax.f32 %v158, %v160
  %162 = vmax.xlane.f32.xlu0 %v161
  %v163 = vpop.xlane.xlu0 %162
  %164 = vst.msk [vmem:[#allocation2 + $0x2] sm:$0x3] %vm153, %v163
  %v165 = vld [vmem:[%s0 + $0x4] sm:$0x3]
  %v168 = vunpack.c.l.s4 1983009808
  %v169 = vunpack.c.0.s8 %v168
  %v170 = vlaneseq
  %v171 = vshrl.u32 %v170, 7
  %v172 = vsub.s32 %v169, %v171
  %v173 = vrot.slane %v165, %v172
  %174 = vrot.lane.b32.xlu0 %v173, 96
  %v175 = vpop.permute.xlu0 %174
  %v177 = vsel %vm18, %v175, 0.0
  %178 = vadd.xlane.f32.xlu0 %v177
  %v179 = vpop.xlane.xlu0 %178
  %v180 = vmul.f32 %v179, %v22
  %vm181 = vcmask 50224
  %182 = vst.msk [vmem:[#allocation2] sm:$0x3] %vm181, %v180
  %vm183 = vcmask 648448
  %v184 = vsel %vm183, %v165, -inf
  %185 = vmax.xlane.f32.xlu0 %v184
  %v186 = vpop.xlane.xlu0 %185
  %187 = vst.msk [vmem:[#allocation2 + $0x2] sm:$0x3] %vm181, %v186
  %v188 = vld [vmem:[%s0 + $0x4] sm:$0x3]
  %v191 = vunpack.c.l.s4 1983009808
  %v192 = vunpack.c.0.s8 %v191
  %v193 = vlaneseq
  %v194 = vshrl.u32 %v193, 7
  %v195 = vsub.s32 %v192, %v194
  %v196 = vrot.slane %v188, %v195
  %197 = vrot.lane.b32.xlu0 %v196, 48
  %v198 = vpop.permute.xlu0 %197
  %v200 = vsel %vm18, %v198, 0.0
  %201 = vadd.xlane.f32.xlu0 %v200
  %v202 = vpop.xlane.xlu0 %201
  %v203 = vmul.f32 %v202, %v22
  %vm204 = vcmask 58424
  %205 = vst.msk [vmem:[#allocation2] sm:$0x3] %vm204, %v203
  %vm206 = vcmask 1042048
  %v207 = vsel %vm206, %v188, -inf
  %208 = vmax.xlane.f32.xlu0 %v207
  %v209 = vpop.xlane.xlu0 %208
  %210 = vst.msk [vmem:[#allocation2 + $0x2] sm:$0x3] %vm204, %v209
  %v211 = vld [vmem:[%s0 + $0x6] sm:$0x3]
  %v212 = vsel %vm18, %v211, 0.0
  %213 = vadd.xlane.f32.xlu0 %v212
  %v214 = vpop.xlane.xlu0 %213
  %v215 = vmul.f32 %v214, %v22
  %vm216 = vcmask 66624
  %217 = vst.msk [vmem:[#allocation2] sm:$0x3] %vm216, %v215
  %v218 = vsel %vm18, %v211, -inf
  %219 = vmax.xlane.f32.xlu0 %v218
  %v220 = vpop.xlane.xlu0 %219
  %221 = vst.msk [vmem:[#allocation2 + $0x2] sm:$0x3] %vm216, %v220
  %v222 = vld [vmem:[%s0 + $0x6] sm:$0x3]
  %v225 = vunpack.c.l.s4 1983009808
  %v226 = vunpack.c.0.s8 %v225
  %v227 = vlaneseq
  %v228 = vshrl.u32 %v227, 7
  %v229 = vsub.s32 %v226, %v228
  %v230 = vrot.slane %v222, %v229
  %231 = vrot.lane.b32.xlu0 %v230, 80
  %v232 = vpop.permute.xlu0 %231
  %v234 = vsel %vm18, %v232, 0.0
  %235 = vadd.xlane.f32.xlu0 %v234
  %v236 = vpop.xlane.xlu0 %235
  %v237 = vmul.f32 %v236, %v22
  %vm238 = vcmask 74824
  %239 = vst.msk [vmem:[#allocation2] sm:$0x3] %vm238, %v237
  %v240 = vsel %vm48, %v222, -inf
  %241 = vmax.xlane.f32.xlu0 %v240
  %v242 = vpop.xlane.xlu0 %241
  %243 = vst.msk [vmem:[#allocation2 + $0x2] sm:$0x3] %vm238, %v242
  %v244 = vld [vmem:[%s0 + $0x6] sm:$0xf]
  %v247 = vunpack.c.l.s4 1983009808
  %v248 = vunpack.c.0.s8 %v247
  %v249 = vlaneseq
  %v250 = vshrl.u32 %v249, 7
  %v251 = vsub.s32 %v248, %v250
  %v252 = vrot.slane %v244, %v251
  %v253 = vcombine.high %v252, %v252
  %254 = vrot.lane.b32.xlu0 %v252, 32
  %v255 = vpop.permute.xlu0 %254
  %256 = vrot.lane.b32.xlu0 %v253, 32
  %v257 = vpop.permute.xlu0 %256
  %v258 = vsel %vm67, %v255, %v257
  %v260 = vsel %vm18, %v258, 0.0
  %261 = vadd.xlane.f32.xlu0 %v260
  %v262 = vpop.xlane.xlu0 %261
  %v263 = vmul.f32 %v262, %v22
  %vm264 = vcmask 83024
  %265 = vst.msk [vmem:[#allocation2] sm:$0x3] %vm264, %v263
  %v268 = vsel %vm78, %v252, -inf
  %v269 = vsel %vm80, %v253, -inf
  %v270 = vmax.f32 %v268, %v269
  %271 = vmax.xlane.f32.xlu0 %v270
  %v272 = vpop.xlane.xlu0 %271
  %273 = vst.msk [vmem:[#allocation2 + $0x2] sm:$0x3] %vm264, %v272
  %v274 = vld [vmem:[%s0 + $0x8] sm:$0x3]
  %v277 = vunpack.c.l.s4 1983009808
  %v278 = vunpack.c.0.s8 %v277
  %v279 = vlaneseq
  %v280 = vshrl.u32 %v279, 7
  %v281 = vsub.s32 %v278, %v280
  %v282 = vrot.slane %v274, %v281
  %283 = vrot.lane.b32.xlu0 %v282, 112
  %v284 = vpop.permute.xlu0 %283
  %v286 = vsel %vm18, %v284, 0.0
  %287 = vadd.xlane.f32.xlu0 %v286
  %v288 = vpop.xlane.xlu0 %287
  %v289 = vmul.f32 %v288, %v22
  %vm290 = vcmask 91224
  %291 = vst.msk [vmem:[#allocation2] sm:$0x3] %vm290, %v289
  %v292 = vsel %vm104, %v274, -inf
  %293 = vmax.xlane.f32.xlu0 %v292
  %v294 = vpop.xlane.xlu0 %293
  %295 = vst.msk [vmem:[#allocation2 + $0x2] sm:$0x3] %vm290, %v294
  %v296 = vld [vmem:[%s0 + $0x8] sm:$0x3]
  %v299 = vunpack.c.l.s4 1983009808
  %v300 = vunpack.c.0.s8 %v299
  %v301 = vlaneseq
  %v302 = vshrl.u32 %v301, 7
  %v303 = vsub.s32 %v300, %v302
  %v304 = vrot.slane %v296, %v303
  %305 = vrot.lane.b32.xlu0 %v304, 64
  %v306 = vpop.permute.xlu0 %305
  %v308 = vsel %vm18, %v306, 0.0
  %309 = vadd.xlane.f32.xlu0 %v308
  %v310 = vpop.xlane.xlu0 %309
  %v311 = vmul.f32 %v310, %v22
  %vm312 = vcmask 99424
  %313 = vst.msk [vmem:[#allocation2] sm:$0x3] %vm312, %v311
  %v314 = vsel %vm127, %v296, -inf
  %315 = vmax.xlane.f32.xlu0 %v314
  %v316 = vpop.xlane.xlu0 %315
  %317 = vst.msk [vmem:[#allocation2 + $0x2] sm:$0x3] %vm312, %v316
  %v318 = vld [vmem:[%s0 + $0x8] sm:$0xf]
  %v321 = vunpack.c.l.s4 1983009808
  %v322 = vunpack.c.0.s8 %v321
  %v323 = vlaneseq
  %v324 = vshrl.u32 %v323, 7
  %v325 = vsub.s32 %v322, %v324
  %v326 = vrot.slane %v318, %v325
  %v327 = vcombine.high %v326, %v326
  %328 = vrot.lane.b32.xlu0 %v326, 16
  %v329 = vpop.permute.xlu0 %328
  %330 = vrot.lane.b32.xlu0 %v327, 16
  %v331 = vpop.permute.xlu0 %330
  %v332 = vsel %vm146, %v329, %v331
  %v334 = vsel %vm18, %v332, 0.0
  %335 = vadd.xlane.f32.xlu0 %v334
  %v336 = vpop.xlane.xlu0 %335
  %v337 = vmul.f32 %v336, %v22
  %vm338 = vcmask 107624
  %339 = vst.msk [vmem:[#allocation2] sm:$0x3] %vm338, %v337
  %v342 = vsel %vm157, %v326, -inf
  %v343 = vsel %vm159, %v327, -inf
  %v344 = vmax.f32 %v342, %v343
  %345 = vmax.xlane.f32.xlu0 %v344
  %v346 = vpop.xlane.xlu0 %345
  %347 = vst.msk [vmem:[#allocation2 + $0x2] sm:$0x3] %vm338, %v346
  %v348 = vld [vmem:[%s0 + $0xa] sm:$0x3]
  %v351 = vunpack.c.l.s4 1983009808
  %v352 = vunpack.c.0.s8 %v351
  %v353 = vlaneseq
  %v354 = vshrl.u32 %v353, 7
  %v355 = vsub.s32 %v352, %v354
  %v356 = vrot.slane %v348, %v355
  %357 = vrot.lane.b32.xlu0 %v356, 96
  %v358 = vpop.permute.xlu0 %357
  %v360 = vsel %vm18, %v358, 0.0
  %361 = vadd.xlane.f32.xlu0 %v360
  %v362 = vpop.xlane.xlu0 %361
  %v363 = vmul.f32 %v362, %v22
  %vm364 = vcmask 115824
  %365 = vst.msk [vmem:[#allocation2] sm:$0x3] %vm364, %v363
  %v366 = vsel %vm183, %v348, -inf
  %367 = vmax.xlane.f32.xlu0 %v366
  %v368 = vpop.xlane.xlu0 %367
  %369 = vst.msk [vmem:[#allocation2 + $0x2] sm:$0x3] %vm364, %v368
  %v370 = vld [vmem:[%s0 + $0xa] sm:$0x3]
  %v373 = vunpack.c.l.s4 1983009808
  %v374 = vunpack.c.0.s8 %v373
  %v375 = vlaneseq
  %v376 = vshrl.u32 %v375, 7
  %v377 = vsub.s32 %v374, %v376
  %v378 = vrot.slane %v370, %v377
  %379 = vrot.lane.b32.xlu0 %v378, 48
  %v380 = vpop.permute.xlu0 %379
  %v382 = vsel %vm18, %v380, 0.0
  %383 = vadd.xlane.f32.xlu0 %v382
  %v384 = vpop.xlane.xlu0 %383
  %v385 = vmul.f32 %v384, %v22
  %vm386 = vcmask 124024
  %387 = vst.msk [vmem:[#allocation2] sm:$0x3] %vm386, %v385
  %v388 = vsel %vm206, %v370, -inf
  %389 = vmax.xlane.f32.xlu0 %v388
  %v390 = vpop.xlane.xlu0 %389
  %391 = vst.msk [vmem:[#allocation2 + $0x2] sm:$0x3] %vm386, %v390
  %v392 = vld [vmem:[#allocation2] sm:$0xf]
  %v393 = vld [vmem:[%s1] sm:$0xff]
  %v394 = vld [vmem:[%s1 + $0x8] sm:$0xff]
  %v396 = vsel %vm146, %v392, 0
  %398 = vmatprep.subr.mxu0 0.0
  %399 = vmatpush1.msra.mxu0 %v393
  %400 = vmatprep.subr.mxu0 0.0
  %401 = vmatpush1.msra.mxu0 %v394
  %402 = vmatprep.subr.mxu0 0.0
  %403 = vmatpush1.msra.mxu0 0.0
  %404 = vmatprep.subr.mxu0 0.0
  %405 = vmatpush1.msra.mxu0 0.0
  %406 = vmatprep.subr.mxu0 0.0
  %407 = vmatpush1.msra.mxu0 0.0
  %408 = vmatprep.subr.mxu0 0.0
  %409 = vmatpush1.msra.mxu0 0.0
  %410 = vmatprep.subr.mxu0 0.0
  %411 = vmatpush1.msra.mxu0 0.0
  %412 = vmatprep.subr.mxu0 0.0
  %413 = vmatpush1.msra.mxu0 0.0
  %414 = vmatprep.subr.mxu0 0.0
  %415 = vmatpush1.msra.mxu0 0.0
  %416 = vmatprep.subr.mxu0 0.0
  %417 = vmatpush1.msra.mxu0 0.0
  %418 = vmatprep.subr.mxu0 0.0
  %419 = vmatpush1.msra.mxu0 0.0
  %420 = vmatprep.subr.mxu0 0.0
  %421 = vmatpush1.msra.mxu0 0.0
  %422 = vmatprep.subr.mxu0 0.0
  %423 = vmatpush1.msra.mxu0 0.0
  %424 = vmatprep.subr.mxu0 0.0
  %425 = vmatpush1.msra.mxu0 0.0
  %426 = vmatprep.subr.mxu0 0.0
  %427 = vmatpush1.msra.mxu0 0.0
  %428 = vmatprep.subr.mxu0 0.0
  %429 = vmatpush1.msra.mxu0 0.0
  %430 = vmatprep.subr.mxu0 0.0
  %431 = vmatpush1.msra.mxu0 0.0
  %432 = vmatprep.subr.mxu0 0.0
  %433 = vmatpush1.msra.mxu0 0.0
  %434 = vmatprep.subr.mxu0 0.0
  %435 = vmatpush1.msra.mxu0 0.0
  %436 = vmatprep.subr.mxu0 0.0
  %437 = vmatpush1.msra.mxu0 0.0
  %438 = vmatprep.subr.mxu0 0.0
  %439 = vmatpush1.msra.mxu0 0.0
  %440 = vmatprep.subr.mxu0 0.0
  %441 = vmatpush1.msra.mxu0 0.0
  %442 = vmatprep.subr.mxu0 0.0
  %443 = vmatpush1.msra.mxu0 0.0
  %444 = vmatprep.subr.mxu0 0.0
  %445 = vmatpush1.msra.mxu0 0.0
  %446 = vmatprep.subr.mxu0 0.0
  %447 = vmatpush1.msra.mxu0 0.0
  %448 = vmatprep.subr.mxu0 0.0
  %449 = vmatpush1.msra.mxu0 0.0
  %450 = vmatprep.subr.mxu0 0.0
  %451 = vmatpush1.msra.mxu0 0.0
  %452 = vmatprep.subr.mxu0 0.0
  %453 = vmatpush1.msra.mxu0 0.0
  %454 = vmatprep.subr.mxu0 0.0
  %455 = vmatpush1.msra.mxu0 0.0
  %456 = vmatprep.subr.mxu0 0.0
  %457 = vmatpush1.msra.mxu0 0.0
  %458 = vmatprep.subr.mxu0 0.0
  %459 = vmatpush1.msra.mxu0 0.0
  %460 = vmatprep.subr.mxu0 0.0
  %461 = vmatpush1.msra.mxu0 0.0
  %462 = vmatprep.mubr.f32.mxu0 0.0
  %463 = vmatmul.mubr.f32.gmra.mrb[0].mxu0 %v396
  %v464 = vpop.f32.mrb[0].mxu0
  %v465 = vadd.f32 0.0, %v464
  %v466 = vpop.f32.mrb[0].mxu0
  %467 = vdwg.mxu0
  %v468 = vmax.f32 %v465, 0.0
  %v469 = vld [vmem:[%s2] sm:$0xf]
  %vm470 = vcmask 31744
  %v472 = vsel %vm470, %v468, 0
  %vm474 = vcmask 1043456
  %v476 = vsel %vm474, %v469, 0
  %478 = vmatprep.subr.mxu0 0.0
  %479 = vmatpush1.msra.mxu0 %v476
  %480 = vmatprep.subr.mxu0 0.0
  %481 = vmatpush1.msra.mxu0 0.0
  %482 = vmatprep.subr.mxu0 0.0
  %483 = vmatpush1.msra.mxu0 0.0
  %484 = vmatprep.subr.mxu0 0.0
  %485 = vmatpush1.msra.mxu0 0.0
  %486 = vmatprep.subr.mxu0 0.0
  %487 = vmatpush1.msra.mxu0 0.0
  %488 = vmatprep.subr.mxu0 0.0
  %489 = vmatpush1.msra.mxu0 0.0
  %490 = vmatprep.subr.mxu0 0.0
  %491 = vmatpush1.msra.mxu0 0.0
  %492 = vmatprep.subr.mxu0 0.0
  %493 = vmatpush1.msra.mxu0 0.0
  %494 = vmatprep.subr.mxu0 0.0
  %495 = vmatpush1.msra.mxu0 0.0
  %496 = vmatprep.subr.mxu0 0.0
  %497 = vmatpush1.msra.mxu0 0.0
  %498 = vmatprep.subr.mxu0 0.0
  %499 = vmatpush1.msra.mxu0 0.0
  %500 = vmatprep.subr.mxu0 0.0
  %501 = vmatpush1.msra.mxu0 0.0
  %502 = vmatprep.subr.mxu0 0.0
  %503 = vmatpush1.msra.mxu0 0.0
  %504 = vmatprep.subr.mxu0 0.0
  %505 = vmatpush1.msra.mxu0 0.0
  %506 = vmatprep.subr.mxu0 0.0
  %507 = vmatpush1.msra.mxu0 0.0
  %508 = vmatprep.subr.mxu0 0.0
  %509 = vmatpush1.msra.mxu0 0.0
  %510 = vmatprep.subr.mxu0 0.0
  %511 = vmatpush1.msra.mxu0 0.0
  %512 = vmatprep.subr.mxu0 0.0
  %513 = vmatpush1.msra.mxu0 0.0
  %514 = vmatprep.subr.mxu0 0.0
  %515 = vmatpush1.msra.mxu0 0.0
  %516 = vmatprep.subr.mxu0 0.0
  %517 = vmatpush1.msra.mxu0 0.0
  %518 = vmatprep.subr.mxu0 0.0
  %519 = vmatpush1.msra.mxu0 0.0
  %520 = vmatprep.subr.mxu0 0.0
  %521 = vmatpush1.msra.mxu0 0.0
  %522 = vmatprep.subr.mxu0 0.0
  %523 = vmatpush1.msra.mxu0 0.0
  %524 = vmatprep.subr.mxu0 0.0
  %525 = vmatpush1.msra.mxu0 0.0
  %526 = vmatprep.subr.mxu0 0.0
  %527 = vmatpush1.msra.mxu0 0.0
  %528 = vmatprep.subr.mxu0 0.0
  %529 = vmatpush1.msra.mxu0 0.0
  %530 = vmatprep.subr.mxu0 0.0
  %531 = vmatpush1.msra.mxu0 0.0
  %532 = vmatprep.subr.mxu0 0.0
  %533 = vmatpush1.msra.mxu0 0.0
  %534 = vmatprep.subr.mxu0 0.0
  %535 = vmatpush1.msra.mxu0 0.0
  %536 = vmatprep.subr.mxu0 0.0
  %537 = vmatpush1.msra.mxu0 0.0
  %538 = vmatprep.subr.mxu0 0.0
  %539 = vmatpush1.msra.mxu0 0.0
  %540 = vmatprep.subr.mxu0 0.0
  %541 = vmatpush1.msra.mxu0 0.0
  %542 = vmatprep.mubr.f32.mxu0 0.0
  %543 = vmatmul.mubr.f32.gmra.mrb[0].mxu0 %v472
  %v544 = vpop.f32.mrb[0].mxu0
  %v545 = vadd.f32 0.0, %v544
  %v546 = vpop.f32.mrb[0].mxu0
  %547 = vdwg.mxu0
  %vm548 = vcmask 125952
  %549 = vst.msk [vmem:[#allocation2] sm:$0xf] %vm548, %v545
  %v550 = vld [vmem:[#allocation2] sm:$0x3]
  %v551 = vld [vmem:[#allocation2 + $0x2] sm:$0x3]
  %v552 = vadd.f32 %v550, %v551
  %v553 = vxor.u32 %v552, 2147483648
  %v554 = vmul.f32 %v553, 1.442695
  %v555 = vpow.pop %v554
  %v556 = vadd.f32 %v555, 1.0
  %v557 = vrcp.pop %v556
  %v558 = vmul.f32 1.0, %v557
  %v559 = vld [vmem:[%s3] sm:$0xff]
  %v560 = vld [vmem:[%s3 + $0x8] sm:$0xff]
  %v561 = vld [vmem:[%s3 + $0x10] sm:$0xff]
  %v562 = vld [vmem:[%s3 + $0x18] sm:$0xff]
  %v563 = vld [vmem:[%s3 + $0x20] sm:$0xff]
  %v564 = vld [vmem:[%s3 + $0x28] sm:$0xff]
  %v565 = vld [vmem:[%s3 + $0x30] sm:$0xff]
  %v566 = vld [vmem:[%s3 + $0x38] sm:$0xff]
  %v567 = vld [vmem:[%s3 + $0x40] sm:$0xff]
  %v568 = vld [vmem:[%s3 + $0x48] sm:$0xff]
  %v569 = vld [vmem:[%s3 + $0x50] sm:$0xff]
  %v570 = vld [vmem:[%s3 + $0x58] sm:$0xff]
  %v572 = vsel %vm146, %v558, 0
  %574 = vmatprep.subr.mxu0 %v560
  %575 = vmatpush1.msra.mxu0 %v559
  %576 = vmatprep.subr.mxu0 %v566
  %577 = vmatpush1.msra.mxu0 %v565
  %578 = vmatprep.subr.mxu0 0.0
  %579 = vmatpush1.msra.mxu0 0.0
  %580 = vmatprep.subr.mxu0 0.0
  %581 = vmatpush1.msra.mxu0 0.0
  %582 = vmatprep.subr.mxu0 0.0
  %583 = vmatpush1.msra.mxu0 0.0
  %584 = vmatprep.subr.mxu0 0.0
  %585 = vmatpush1.msra.mxu0 0.0
  %586 = vmatprep.subr.mxu0 0.0
  %587 = vmatpush1.msra.mxu0 0.0
  %588 = vmatprep.subr.mxu0 0.0
  %589 = vmatpush1.msra.mxu0 0.0
  %590 = vmatprep.subr.mxu0 0.0
  %591 = vmatpush1.msra.mxu0 0.0
  %592 = vmatprep.subr.mxu0 0.0
  %593 = vmatpush1.msra.mxu0 0.0
  %594 = vmatprep.subr.mxu0 0.0
  %595 = vmatpush1.msra.mxu0 0.0
  %596 = vmatprep.subr.mxu0 0.0
  %597 = vmatpush1.msra.mxu0 0.0
  %598 = vmatprep.subr.mxu0 0.0
  %599 = vmatpush1.msra.mxu0 0.0
  %600 = vmatprep.subr.mxu0 0.0
  %601 = vmatpush1.msra.mxu0 0.0
  %602 = vmatprep.subr.mxu0 0.0
  %603 = vmatpush1.msra.mxu0 0.0
  %604 = vmatprep.subr.mxu0 0.0
  %605 = vmatpush1.msra.mxu0 0.0
  %606 = vmatprep.subr.mxu0 0.0
  %607 = vmatpush1.msra.mxu0 0.0
  %608 = vmatprep.subr.mxu0 0.0
  %609 = vmatpush1.msra.mxu0 0.0
  %610 = vmatprep.subr.mxu0 0.0
  %611 = vmatpush1.msra.mxu0 0.0
  %612 = vmatprep.subr.mxu0 0.0
  %613 = vmatpush1.msra.mxu0 0.0
  %614 = vmatprep.subr.mxu0 0.0
  %615 = vmatpush1.msra.mxu0 0.0
  %616 = vmatprep.subr.mxu0 0.0
  %617 = vmatpush1.msra.mxu0 0.0
  %618 = vmatprep.subr.mxu0 0.0
  %619 = vmatpush1.msra.mxu0 0.0
  %620 = vmatprep.subr.mxu0 0.0
  %621 = vmatpush1.msra.mxu0 0.0
  %622 = vmatprep.subr.mxu0 0.0
  %623 = vmatpush1.msra.mxu0 0.0
  %624 = vmatprep.subr.mxu0 0.0
  %625 = vmatpush1.msra.mxu0 0.0
  %626 = vmatprep.subr.mxu0 0.0
  %627 = vmatpush1.msra.mxu0 0.0
  %628 = vmatprep.subr.mxu0 0.0
  %629 = vmatpush1.msra.mxu0 0.0
  %630 = vmatprep.subr.mxu0 0.0
  %631 = vmatpush1.msra.mxu0 0.0
  %632 = vmatprep.subr.mxu0 0.0
  %633 = vmatpush1.msra.mxu0 0.0
  %634 = vmatprep.subr.mxu0 0.0
  %635 = vmatpush1.msra.mxu0 0.0
  %636 = vmatprep.subr.mxu0 0.0
  %637 = vmatpush1.msra.mxu0 0.0
  %638 = vmatprep.mubr.f32.mxu0 0.0
  %639 = vmatmul.mubr.f32.gmra.mrb[0].mxu0 %v572
  %v640 = vpop.f32.mrb[0].mxu0
  %v641 = vadd.f32 0.0, %v640
  %v642 = vpop.f32.mrb[0].mxu0
  %v643 = vadd.f32 0.0, %v642
  %644 = vdwg.mxu0
  %645 = vmatprep.subr.mxu0 %v562
  %646 = vmatpush1.msra.mxu0 %v561
  %647 = vmatprep.subr.mxu0 %v568
  %648 = vmatpush1.msra.mxu0 %v567
  %649 = vmatprep.subr.mxu0 0.0
  %650 = vmatpush1.msra.mxu0 0.0
  %651 = vmatprep.subr.mxu0 0.0
  %652 = vmatpush1.msra.mxu0 0.0
  %653 = vmatprep.subr.mxu0 0.0
  %654 = vmatpush1.msra.mxu0 0.0
  %655 = vmatprep.subr.mxu0 0.0
  %656 = vmatpush1.msra.mxu0 0.0
  %657 = vmatprep.subr.mxu0 0.0
  %658 = vmatpush1.msra.mxu0 0.0
  %659 = vmatprep.subr.mxu0 0.0
  %660 = vmatpush1.msra.mxu0 0.0
  %661 = vmatprep.subr.mxu0 0.0
  %662 = vmatpush1.msra.mxu0 0.0
  %663 = vmatprep.subr.mxu0 0.0
  %664 = vmatpush1.msra.mxu0 0.0
  %665 = vmatprep.subr.mxu0 0.0
  %666 = vmatpush1.msra.mxu0 0.0
  %667 = vmatprep.subr.mxu0 0.0
  %668 = vmatpush1.msra.mxu0 0.0
  %669 = vmatprep.subr.mxu0 0.0
  %670 = vmatpush1.msra.mxu0 0.0
  %671 = vmatprep.subr.mxu0 0.0
  %672 = vmatpush1.msra.mxu0 0.0
  %673 = vmatprep.subr.mxu0 0.0
  %674 = vmatpush1.msra.mxu0 0.0
  %675 = vmatprep.subr.mxu0 0.0
  %676 = vmatpush1.msra.mxu0 0.0
  %677 = vmatprep.subr.mxu0 0.0
  %678 = vmatpush1.msra.mxu0 0.0
  %679 = vmatprep.subr.mxu0 0.0
  %680 = vmatpush1.msra.mxu0 0.0
  %681 = vmatprep.subr.mxu0 0.0
  %682 = vmatpush1.msra.mxu0 0.0
  %683 = vmatprep.subr.mxu0 0.0
  %684 = vmatpush1.msra.mxu0 0.0
  %685 = vmatprep.subr.mxu0 0.0
  %686 = vmatpush1.msra.mxu0 0.0
  %687 = vmatprep.subr.mxu0 0.0
  %688 = vmatpush1.msra.mxu0 0.0
  %689 = vmatprep.subr.mxu0 0.0
  %690 = vmatpush1.msra.mxu0 0.0
  %691 = vmatprep.subr.mxu0 0.0
  %692 = vmatpush1.msra.mxu0 0.0
  %693 = vmatprep.subr.mxu0 0.0
  %694 = vmatpush1.msra.mxu0 0.0
  %695 = vmatprep.subr.mxu0 0.0
  %696 = vmatpush1.msra.mxu0 0.0
  %697 = vmatprep.subr.mxu0 0.0
  %698 = vmatpush1.msra.mxu0 0.0
  %699 = vmatprep.subr.mxu0 0.0
  %700 = vmatpush1.msra.mxu0 0.0
  %701 = vmatprep.subr.mxu0 0.0
  %702 = vmatpush1.msra.mxu0 0.0
  %703 = vmatprep.subr.mxu0 0.0
  %704 = vmatpush1.msra.mxu0 0.0
  %705 = vmatprep.subr.mxu0 0.0
  %706 = vmatpush1.msra.mxu0 0.0
  %707 = vmatprep.subr.mxu0 0.0
  %708 = vmatpush1.msra.mxu0 0.0
  %709 = vmatprep.mubr.f32.mxu0 0.0
  %710 = vmatmul.mubr.f32.gmra.mrb[0].mxu0 %v572
  %v711 = vpop.f32.mrb[0].mxu0
  %v712 = vadd.f32 0.0, %v711
  %v713 = vpop.f32.mrb[0].mxu0
  %v714 = vadd.f32 0.0, %v713
  %715 = vdwg.mxu0
  %716 = vmatprep.subr.mxu0 %v564
  %717 = vmatpush1.msra.mxu0 %v563
  %718 = vmatprep.subr.mxu0 %v570
  %719 = vmatpush1.msra.mxu0 %v569
  %720 = vmatprep.subr.mxu0 0.0
  %721 = vmatpush1.msra.mxu0 0.0
  %722 = vmatprep.subr.mxu0 0.0
  %723 = vmatpush1.msra.mxu0 0.0
  %724 = vmatprep.subr.mxu0 0.0
  %725 = vmatpush1.msra.mxu0 0.0
  %726 = vmatprep.subr.mxu0 0.0
  %727 = vmatpush1.msra.mxu0 0.0
  %728 = vmatprep.subr.mxu0 0.0
  %729 = vmatpush1.msra.mxu0 0.0
  %730 = vmatprep.subr.mxu0 0.0
  %731 = vmatpush1.msra.mxu0 0.0
  %732 = vmatprep.subr.mxu0 0.0
  %733 = vmatpush1.msra.mxu0 0.0
  %734 = vmatprep.subr.mxu0 0.0
  %735 = vmatpush1.msra.mxu0 0.0
  %736 = vmatprep.subr.mxu0 0.0
  %737 = vmatpush1.msra.mxu0 0.0
  %738 = vmatprep.subr.mxu0 0.0
  %739 = vmatpush1.msra.mxu0 0.0
  %740 = vmatprep.subr.mxu0 0.0
  %741 = vmatpush1.msra.mxu0 0.0
  %742 = vmatprep.subr.mxu0 0.0
  %743 = vmatpush1.msra.mxu0 0.0
  %744 = vmatprep.subr.mxu0 0.0
  %745 = vmatpush1.msra.mxu0 0.0
  %746 = vmatprep.subr.mxu0 0.0
  %747 = vmatpush1.msra.mxu0 0.0
  %748 = vmatprep.subr.mxu0 0.0
  %749 = vmatpush1.msra.mxu0 0.0
  %750 = vmatprep.subr.mxu0 0.0
  %751 = vmatpush1.msra.mxu0 0.0
  %752 = vmatprep.subr.mxu0 0.0
  %753 = vmatpush1.msra.mxu0 0.0
  %754 = vmatprep.subr.mxu0 0.0
  %755 = vmatpush1.msra.mxu0 0.0
  %756 = vmatprep.subr.mxu0 0.0
  %757 = vmatpush1.msra.mxu0 0.0
  %758 = vmatprep.subr.mxu0 0.0
  %759 = vmatpush1.msra.mxu0 0.0
  %760 = vmatprep.subr.mxu0 0.0
  %761 = vmatpush1.msra.mxu0 0.0
  %762 = vmatprep.subr.mxu0 0.0
  %763 = vmatpush1.msra.mxu0 0.0
  %764 = vmatprep.subr.mxu0 0.0
  %765 = vmatpush1.msra.mxu0 0.0
  %766 = vmatprep.subr.mxu0 0.0
  %767 = vmatpush1.msra.mxu0 0.0
  %768 = vmatprep.subr.mxu0 0.0
  %769 = vmatpush1.msra.mxu0 0.0
  %770 = vmatprep.subr.mxu0 0.0
  %771 = vmatpush1.msra.mxu0 0.0
  %772 = vmatprep.subr.mxu0 0.0
  %773 = vmatpush1.msra.mxu0 0.0
  %774 = vmatprep.subr.mxu0 0.0
  %775 = vmatpush1.msra.mxu0 0.0
  %776 = vmatprep.subr.mxu0 0.0
  %777 = vmatpush1.msra.mxu0 0.0
  %778 = vmatprep.subr.mxu0 0.0
  %779 = vmatpush1.msra.mxu0 0.0
  %780 = vmatprep.mubr.f32.mxu0 0.0
  %781 = vmatmul.mubr.f32.gmra.mrb[0].mxu0 %v572
  %v782 = vpop.f32.mrb[0].mxu0
  %v783 = vadd.f32 0.0, %v782
  %v784 = vpop.f32.mrb[0].mxu0
  %v785 = vadd.f32 0.0, %v784
  %786 = vdwg.mxu0
  %v787 = vld [vmem:[%s0] sm:$0xff]
  %v788 = vld [vmem:[%s0 + $0x8] sm:$0xf]
  %v791 = vcombine.high %v787, %v787
  %v793 = vunpack.c.l.s4 1983009808
  %v794 = vunpack.c.0.s8 %v793
  %v795 = vlaneseq
  %v796 = vshrl.u32 %v795, 7
  %v797 = vsub.s32 %v794, %v796
  %v798 = vrot.slane %v787, %v797
  %v800 = vunpack.c.l.s4 1983009808
  %v801 = vunpack.c.0.s8 %v800
  %v802 = vlaneseq
  %v803 = vshrl.u32 %v802, 7
  %v804 = vsub.s32 %v801, %v803
  %v805 = vrot.slane %v791, %v804
  %v806 = vcombine.high %v798, %v798
  %v807 = vcombine.high %v805, %v805
  %v809 = vunpack.c.l.s4 1983009808
  %v810 = vunpack.c.0.s8 %v809
  %v811 = vlaneseq
  %v812 = vshrl.u32 %v811, 7
  %v813 = vsub.s32 %v810, %v812
  %v814 = vrot.slane %v788, %v813
  %v815 = vcombine.high %v814, %v814
  %v822 = vmul.f32 %v641, %v798
  %v823 = vmul.f32 %v643, %v806
  %v824 = vmul.f32 %v712, %v805
  %v825 = vmul.f32 %v714, %v807
  %v826 = vmul.f32 %v783, %v814
  %v827 = vmul.f32 %v785, %v815
  %v834 = vcombine.low %v822, %v823
  %v835 = vcombine.low %v824, %v825
  %v837 = vunpack.c.l.s4 1983009808
  %v838 = vunpack.c.0.s8 %v837
  %v839 = vlaneseq
  %v840 = vshrl.u32 %v839, 7
  %v841 = vsub.s32 %v838, %v840
  %v842 = vrot.slane %v834, %v841
  %v844 = vunpack.c.l.s4 1983009808
  %v845 = vunpack.c.0.s8 %v844
  %v846 = vlaneseq
  %v847 = vshrl.u32 %v846, 7
  %v848 = vsub.s32 %v845, %v847
  %v849 = vrot.slane %v835, %v848
  %v850 = vcombine.low %v842, %v849
  %v851 = vcombine.low %v826, %v827
  %v853 = vunpack.c.l.s4 1983009808
  %v854 = vunpack.c.0.s8 %v853
  %v855 = vlaneseq
  %v856 = vshrl.u32 %v855, 7
  %v857 = vsub.s32 %v854, %v856
  %v858 = vrot.slane %v851, %v857
  %861 = vst [vmem:[%s4] sm:$0xff] %v850
  %862 = vst [vmem:[%s4 + $0x8] sm:$0xf] %v858
  // Predicated region
  $region18: #{lfam_forward.1} parent=0 // pred_check
    _
  $region19: #{lfam_forward.1} parent=0 // pred_check_branch
    %864 = sbr.rel (0) target = $region21
  $region20: #{lfam_forward.1} parent=0 // pred_region
    _
  $region21: #{lfam_forward.1} parent=0 // pred_fallthru
    _
  // Predicated region
  $region22: #{lfam_forward.1} parent=0 // pred_check
    _
  $region23: #{lfam_forward.1} parent=0 // pred_check_branch
    %866 = sbr.rel (0) target = $region25
  $region24: #{lfam_forward.1} parent=0 // pred_region
    _
  $region25: #{lfam_forward.1} parent=0 // pred_fallthru
    _

</llo_original>
